<compile_context>
chip_gen: v5e
topology: v5e:2x2
jax: 0.10.0
libtpu: 0.0.40
codegen_flags: <defaults>
</compile_context>

<pallas_src>
import functools
import math

import jax
import jax.numpy as jnp
from jax.experimental import pallas as pl
from jax.experimental.pallas import tpu as pltpu

LANE = 128
SUBLANE = 8
F_IN = 3    # input features
H1 = 16     # hidden 1
H2 = 32     # hidden 2
F_OUT = 2   # output features


def _round_up(n, m):
    return ((n + m - 1) // m) * m


def mlp_kernel(x_ref, w1_ref, b1_ref, w2_ref, b2_ref, w3_ref, b3_ref, o_ref):
    # x_ref: (TB, 3). Weights are zero-padded to 128 lanes; pads contribute 0.
    x = x_ref[...]                                      # (TB, 3)
    w1 = w1_ref[...]                                    # (3, 128)

    # Layer 1: Linear(3, 16) + ReLU — K=3 contraction done as 3 broadcast
    # mul-adds on the VPU (cheaper/simpler than a degenerate MXU matmul).
    h1 = (x[:, 0:1] * w1[0:1, :]
          + x[:, 1:2] * w1[1:2, :]
          + x[:, 2:3] * w1[2:3, :])                     # (TB, 128)
    h1 = jnp.maximum(h1 + b1_ref[...], 0.0)

    # Layer 2: Linear(16, 32) + ReLU (padded 128x128 weights, MXU).
    h2 = jnp.dot(h1, w2_ref[...], preferred_element_type=jnp.float32)
    h2 = jnp.maximum(h2 + b2_ref[...], 0.0)             # (TB, 128)

    # Layer 3: Linear(32, 2).
    out = jnp.dot(h2, w3_ref[...], preferred_element_type=jnp.float32)
    out = out + b3_ref[...]                             # (TB, 128)

    # Store only the 2 real output columns (tiny HBM write traffic).
    o_ref[...] = out[:, :F_OUT].astype(o_ref.dtype)


def prepare_params(params):
    """Pad weights/biases to lane-aligned shapes ONCE (hoisted out of forward)."""

    def pad2(a, r, c):
        a = jnp.asarray(a, jnp.float32)
        return jnp.zeros((r, c), jnp.float32).at[: a.shape[0], : a.shape[1]].set(a)

    return {
        "w1": pad2(params["w1"], F_IN, LANE),          # (3, 128)
        "b1": pad2(params["b1"][None, :], 1, LANE),    # (1, 128)
        "w2": pad2(params["w2"], LANE, LANE),          # (128, 128)
        "b2": pad2(params["b2"][None, :], 1, LANE),    # (1, 128)
        "w3": pad2(params["w3"], LANE, LANE),          # (128, 128)
        "b3": pad2(params["b3"][None, :], 1, LANE),    # (1, 128)
    }


@functools.partial(jax.jit, static_argnames=("block_b",))
def generator_forward(x, padded_params, *, block_b=1024):
    """x: [B, 3] float32. padded_params: output of prepare_params()."""
    B, fin = x.shape
    assert fin == F_IN

    tb = min(block_b, _round_up(B, SUBLANE))
    tb = _round_up(tb, SUBLANE)
    bp = _round_up(B, tb)          # batch padded to a multiple of the tile
    grid = (bp // tb,)

    xp = x.astype(jnp.float32)
    if bp != B:
        xp = jnp.zeros((bp, F_IN), jnp.float32).at[:B, :].set(xp)

    p = padded_params
    const = lambda shape: pl.BlockSpec(shape, lambda i: (0, 0))  # VMEM-resident

    out_p = pl.pallas_call(
        mlp_kernel,
        out_shape=jax.ShapeDtypeStruct((bp, F_OUT), jnp.float32),
        grid=grid,
        in_specs=[
            pl.BlockSpec((tb, F_IN), lambda i: (i, 0)),  # x: tiled over batch
            const((F_IN, LANE)),                         # w1
            const((1, LANE)),                            # b1
            const((LANE, LANE)),                         # w2
            const((1, LANE)),                            # b2
            const((LANE, LANE)),                         # w3
            const((1, LANE)),                            # b3
        ],
        out_specs=pl.BlockSpec((tb, F_OUT), lambda i: (i, 0)),
        compiler_params=pltpu.CompilerParams(
            dimension_semantics=("parallel",),           # 2 TCs on v7x
        ),
    )(xp, p["w1"], p["b1"], p["w2"], p["b2"], p["w3"], p["b3"])

    return out_p[:B] if bp != B else out_p


def init_params(key):
    """Deterministic init mirroring PyTorch Linear default (U[-1/sqrt(fan_in), +])."""
    shapes = [(F_IN, H1), (H1, H2), (H2, F_OUT)]
    params = {}
    keys = jax.random.split(key, 2 * len(shapes))
    for i, (fin, fout) in enumerate(shapes):
        bound = 1.0 / math.sqrt(fin)
        params[f"w{i + 1}"] = jax.random.uniform(
            keys[2 * i], (fin, fout), jnp.float32, minval=-bound, maxval=bound
        )
        params[f"b{i + 1}"] = jax.random.uniform(
            keys[2 * i + 1], (fout,), jnp.float32, minval=-bound, maxval=bound
        )
    return params


def _ref(x, p):
    h = jnp.maximum(x @ p["w1"] + p["b1"], 0.0)
    h = jnp.maximum(h @ p["w2"] + p["b2"], 0.0)
    return h @ p["w3"] + p["b3"]


if __name__ == "__main__":
    key = jax.random.PRNGKey(0)
    k_param, k_x, k_x2 = jax.random.split(key, 3)
    params = init_params(k_param)
    padded = prepare_params(params)   # padded once, reused across calls

    # Small primary test (B=8, features=3).
    B = 8
    x = jax.random.normal(k_x, (B, F_IN), jnp.float32)
    out = jax.block_until_ready(generator_forward(x, padded))
    expected = _ref(x, params)
    assert out.shape == (B, F_OUT)
    assert jnp.allclose(out, expected, atol=1e-5, rtol=1e-5)

    # Secondary check exercising the batch grid + ragged-batch row padding.
    B2 = 600
    x2 = jax.random.normal(k_x2, (B2, F_IN), jnp.float32)
    out2 = jax.block_until_ready(generator_forward(x2, padded, block_b=256))
    assert out2.shape == (B2, F_OUT)
    assert jnp.allclose(out2, _ref(x2, params), atol=1e-5, rtol=1e-5)

    print("KERNEL_OK")
</pallas_src>

<mosaic_0001>
module attributes {stable_mosaic.version = 11 : i64} {
  func.func @mlp_kernel(%arg0: i32, %arg1: memref<8x3xf32, #tpu.memory_space<vmem>>, %arg2: memref<3x128xf32, #tpu.memory_space<vmem>>, %arg3: memref<1x128xf32, #tpu.memory_space<vmem>>, %arg4: memref<128x128xf32, #tpu.memory_space<vmem>>, %arg5: memref<1x128xf32, #tpu.memory_space<vmem>>, %arg6: memref<128x128xf32, #tpu.memory_space<vmem>>, %arg7: memref<1x128xf32, #tpu.memory_space<vmem>>, %arg8: memref<8x2xf32, #tpu.memory_space<vmem>>) attributes {dimension_semantics = [#tpu.dimension_semantics<parallel>], iteration_bounds = array<i64: 1>, scalar_prefetch = 0 : i64, scratch_operands = 0 : i64, tpu.core_type = #tpu.core_type<tc>, window_params = [{transform_indices = @transform_0, window_bounds = array<i64: 8, 3>}, {pipeline_mode = #tpu.pipeline_mode<synchronous>, transform_indices = @transform_1, window_bounds = array<i64: 3, 128>}, {pipeline_mode = #tpu.pipeline_mode<synchronous>, transform_indices = @transform_2, window_bounds = array<i64: 1, 128>}, {pipeline_mode = #tpu.pipeline_mode<synchronous>, transform_indices = @transform_3, window_bounds = array<i64: 128, 128>}, {pipeline_mode = #tpu.pipeline_mode<synchronous>, transform_indices = @transform_4, window_bounds = array<i64: 1, 128>}, {pipeline_mode = #tpu.pipeline_mode<synchronous>, transform_indices = @transform_5, window_bounds = array<i64: 128, 128>}, {pipeline_mode = #tpu.pipeline_mode<synchronous>, transform_indices = @transform_6, window_bounds = array<i64: 1, 128>}, {transform_indices = @transform_7, window_bounds = array<i64: 8, 2>}]} {
    %c0 = arith.constant 0 : index
    %c0_0 = arith.constant 0 : index
    %0 = vector.load %arg1[%c0, %c0_0] : memref<8x3xf32, #tpu.memory_space<vmem>>, vector<8x3xf32>
    %c0_1 = arith.constant 0 : index
    %c0_2 = arith.constant 0 : index
    %1 = vector.load %arg2[%c0_1, %c0_2] : memref<3x128xf32, #tpu.memory_space<vmem>>, vector<3x128xf32>
    %2 = vector.extract_strided_slice %0 {offsets = [0, 0], sizes = [8, 1], strides = [1, 1]} : vector<8x3xf32> to vector<8x1xf32>
    %3 = vector.extract_strided_slice %1 {offsets = [0, 0], sizes = [1, 128], strides = [1, 1]} : vector<3x128xf32> to vector<1x128xf32>
    %4 = vector.broadcast %2 : vector<8x1xf32> to vector<8x128xf32>
    %5 = vector.broadcast %3 : vector<1x128xf32> to vector<8x128xf32>
    %6 = arith.mulf %4, %5 : vector<8x128xf32>
    %7 = vector.extract_strided_slice %0 {offsets = [0, 1], sizes = [8, 1], strides = [1, 1]} : vector<8x3xf32> to vector<8x1xf32>
    %8 = vector.extract_strided_slice %1 {offsets = [1, 0], sizes = [1, 128], strides = [1, 1]} : vector<3x128xf32> to vector<1x128xf32>
    %9 = vector.broadcast %7 : vector<8x1xf32> to vector<8x128xf32>
    %10 = vector.broadcast %8 : vector<1x128xf32> to vector<8x128xf32>
    %11 = arith.mulf %9, %10 : vector<8x128xf32>
    %12 = arith.addf %6, %11 : vector<8x128xf32>
    %13 = vector.extract_strided_slice %0 {offsets = [0, 2], sizes = [8, 1], strides = [1, 1]} : vector<8x3xf32> to vector<8x1xf32>
    %14 = vector.extract_strided_slice %1 {offsets = [2, 0], sizes = [1, 128], strides = [1, 1]} : vector<3x128xf32> to vector<1x128xf32>
    %15 = vector.broadcast %13 : vector<8x1xf32> to vector<8x128xf32>
    %16 = vector.broadcast %14 : vector<1x128xf32> to vector<8x128xf32>
    %17 = arith.mulf %15, %16 : vector<8x128xf32>
    %18 = arith.addf %12, %17 : vector<8x128xf32>
    %c0_3 = arith.constant 0 : index
    %c0_4 = arith.constant 0 : index
    %19 = vector.load %arg3[%c0_3, %c0_4] : memref<1x128xf32, #tpu.memory_space<vmem>>, vector<1x128xf32>
    %20 = vector.broadcast %19 : vector<1x128xf32> to vector<8x128xf32>
    %21 = arith.addf %18, %20 : vector<8x128xf32>
    %cst = arith.constant 0.000000e+00 : f32
    %22 = vector.broadcast %cst : f32 to vector<8x128xf32>
    %23 = arith.maximumf %21, %22 : vector<8x128xf32>
    %c0_5 = arith.constant 0 : index
    %c0_6 = arith.constant 0 : index
    %24 = vector.load %arg4[%c0_5, %c0_6] : memref<128x128xf32, #tpu.memory_space<vmem>>, vector<128x128xf32>
    %cst_7 = arith.constant dense<0.000000e+00> : vector<8x128xf32>
    %25 = tpu.matmul %23, %24, %cst_7 {dimension_numbers = #tpu.dot_dimension_numbers<[1], [0], [0], [1], [0, 0, 1, 1], [], []>} : vector<8x128xf32>, vector<128x128xf32>, vector<8x128xf32> -> vector<8x128xf32>
    %c0_8 = arith.constant 0 : index
    %c0_9 = arith.constant 0 : index
    %26 = vector.load %arg5[%c0_8, %c0_9] : memref<1x128xf32, #tpu.memory_space<vmem>>, vector<1x128xf32>
    %27 = vector.broadcast %26 : vector<1x128xf32> to vector<8x128xf32>
    %28 = arith.addf %25, %27 : vector<8x128xf32>
    %cst_10 = arith.constant 0.000000e+00 : f32
    %29 = vector.broadcast %cst_10 : f32 to vector<8x128xf32>
    %30 = arith.maximumf %28, %29 : vector<8x128xf32>
    %c0_11 = arith.constant 0 : index
    %c0_12 = arith.constant 0 : index
    %31 = vector.load %arg6[%c0_11, %c0_12] : memref<128x128xf32, #tpu.memory_space<vmem>>, vector<128x128xf32>
    %cst_13 = arith.constant dense<0.000000e+00> : vector<8x128xf32>
    %32 = tpu.matmul %30, %31, %cst_13 {dimension_numbers = #tpu.dot_dimension_numbers<[1], [0], [0], [1], [0, 0, 1, 1], [], []>} : vector<8x128xf32>, vector<128x128xf32>, vector<8x128xf32> -> vector<8x128xf32>
    %c0_14 = arith.constant 0 : index
    %c0_15 = arith.constant 0 : index
    %33 = vector.load %arg7[%c0_14, %c0_15] : memref<1x128xf32, #tpu.memory_space<vmem>>, vector<1x128xf32>
    %34 = vector.broadcast %33 : vector<1x128xf32> to vector<8x128xf32>
    %35 = arith.addf %32, %34 : vector<8x128xf32>
    %36 = vector.extract_strided_slice %35 {offsets = [0, 0], sizes = [8, 2], strides = [1, 1]} : vector<8x128xf32> to vector<8x2xf32>
    %c0_16 = arith.constant 0 : index
    %c0_17 = arith.constant 0 : index
    %37 = vector.load %arg8[%c0_16, %c0_17] : memref<8x2xf32, #tpu.memory_space<vmem>>, vector<8x2xf32>
    tpu.vector_store %arg8[%c0_16, %c0_17], %36 {strides = array<i32>} : memref<8x2xf32, #tpu.memory_space<vmem>>, vector<8x2xf32>,
    return
  }
  func.func @transform_0(%arg0: i32) -> (i32, i32) {
    %c0_i32 = arith.constant 0 : i32
    %c0_i32_0 = arith.constant 0 : i32
    return %arg0, %c0_i32 : i32, i32
  }
  func.func @transform_1(%arg0: i32) -> (i32, i32) {
    %c0_i32 = arith.constant 0 : i32
    %c0_i32_0 = arith.constant 0 : i32
    %c0_i32_1 = arith.constant 0 : i32
    return %c0_i32, %c0_i32_0 : i32, i32
  }
  func.func @transform_2(%arg0: i32) -> (i32, i32) {
    %c0_i32 = arith.constant 0 : i32
    %c0_i32_0 = arith.constant 0 : i32
    %c0_i32_1 = arith.constant 0 : i32
    return %c0_i32, %c0_i32_0 : i32, i32
  }
  func.func @transform_3(%arg0: i32) -> (i32, i32) {
    %c0_i32 = arith.constant 0 : i32
    %c0_i32_0 = arith.constant 0 : i32
    %c0_i32_1 = arith.constant 0 : i32
    return %c0_i32, %c0_i32_0 : i32, i32
  }
  func.func @transform_4(%arg0: i32) -> (i32, i32) {
    %c0_i32 = arith.constant 0 : i32
    %c0_i32_0 = arith.constant 0 : i32
    %c0_i32_1 = arith.constant 0 : i32
    return %c0_i32, %c0_i32_0 : i32, i32
  }
  func.func @transform_5(%arg0: i32) -> (i32, i32) {
    %c0_i32 = arith.constant 0 : i32
    %c0_i32_0 = arith.constant 0 : i32
    %c0_i32_1 = arith.constant 0 : i32
    return %c0_i32, %c0_i32_0 : i32, i32
  }
  func.func @transform_6(%arg0: i32) -> (i32, i32) {
    %c0_i32 = arith.constant 0 : i32
    %c0_i32_0 = arith.constant 0 : i32
    %c0_i32_1 = arith.constant 0 : i32
    return %c0_i32, %c0_i32_0 : i32, i32
  }
  func.func @transform_7(%arg0: i32) -> (i32, i32) {
    %c0_i32 = arith.constant 0 : i32
    %c0_i32_0 = arith.constant 0 : i32
    return %arg0, %c0_i32 : i32, i32
  }
}

</mosaic_0001>

<llo_original>
// kernel: generator_forward.1
$region0: #{generator_forward.1}
  #allocation0 [shape = 'u32[]', space=smem, size = 0x4, offset = 0x4, fixed_abs, tag = 'smem constant byte address 0x4 - core index']
  #allocation1 [shape = 'u32[72,128]{1,0:T(1,128)}', space=vmem, size = 0x9000, scoped, tag = 'internal scratch']
  %s0 = inlined_call_operand.vmem [shape: f32[8,3], index: 0, kind: input, shape index: {}]
  %s1 = inlined_call_operand.vmem [shape: f32[3,128], index: 1, kind: input, shape index: {}]
  %s2 = inlined_call_operand.vmem [shape: f32[1,128], index: 2, kind: input, shape index: {}]
  %s3 = inlined_call_operand.hbm [shape: f32[128,128], index: 3, kind: input, shape index: {}]
  %s4 = inlined_call_operand.vmem [shape: f32[1,128], index: 4, kind: input, shape index: {}]
  %s5 = inlined_call_operand.hbm [shape: f32[128,128], index: 5, kind: input, shape index: {}]
  %s6 = inlined_call_operand.vmem [shape: f32[1,128], index: 6, kind: input, shape index: {}]
  %s7 = inlined_call_operand.vmem [shape: f32[8,2], index: 7, kind: output, shape index: {}]
  %s8 = sld [smem:[#allocation0]]
  $region46: #{generator_forward.1} parent=0
    _
  %s10 = ssub.s32 1, %s8
  %s11 = scalar_select 0, %s10, %s8
  $region1: #{generator_forward.1} parent=0
    #allocation2 [shape = 'u8[65536]{0}', space=vmem, size = 0x10000, scoped, tag = 'input window, operand 3, single buffered']
    #allocation3 [shape = 's32[1]{0}', space=sflag, size = 0x4, scoped, tag = 'scoped memory for generator_forward.1']
    #allocation4 [shape = 'u8[65536]{0}', space=vmem, size = 0x10000, scoped, tag = 'input window, operand 5, single buffered']
    #allocation5 [shape = 's32[1]{0}', space=sflag, size = 0x4, scoped, tag = 'scoped memory for generator_forward.1']
    %12 = vsyncpa [#allocation3], 0
    %13 = vsyncpa [#allocation5], 0
    // Predicated region
    $region2: #{generator_forward.1} parent=1 // pred_check
      _
    $region3: #{generator_forward.1} parent=1 // pred_check_branch
      %15 = sbr.rel (0) target = $region5
    $region4: #{generator_forward.1} parent=1 // pred_region
      _
    $region5: #{generator_forward.1} parent=1 // pred_fallthru
      _
    // Predicated region
    $region6: #{generator_forward.1} parent=1 // pred_check
      _
    $region7: #{generator_forward.1} parent=1 // pred_check_branch
      %17 = sbr.rel (0) target = $region9
    $region8: #{generator_forward.1} parent=1 // pred_region
      _
    $region9: #{generator_forward.1} parent=1 // pred_fallthru
      _
    // Predicated region
    $region10: #{generator_forward.1} parent=1 // pred_check
      _
    $region11: #{generator_forward.1} parent=1 // pred_check_branch
      %19 = sbr.rel (0) target = $region13
    $region12: #{generator_forward.1} parent=1 // pred_region
      _
    $region13: #{generator_forward.1} parent=1 // pred_fallthru
      _
    // Predicated region
    $region14: #{generator_forward.1} parent=1 // pred_check
      _
    $region15: #{generator_forward.1} parent=1 // pred_check_branch
      %21 = sbr.rel (0) target = $region17
    $region16: #{generator_forward.1} parent=1 // pred_region
      %23 = vsyncadd [#allocation3], 0
      %s24 = sshll.u32 %s3, 4
      %s25 = int_to_ptr.hbm [resolvable:$true] %s24
      %s26 = sshll.u32 [#allocation2], 4
      %s27 = int_to_ptr.vmem [resolvable:$true] %s26
      %32 = dma.hbm_to_vmem [thread:$0]  %s25, 2048, %s27, [#allocation3], 128, 128, 8
    $region17: #{generator_forward.1} parent=1 // pred_fallthru
      _
    // Predicated region
    $region18: #{generator_forward.1} parent=1 // pred_check
      _
    $region19: #{generator_forward.1} parent=1 // pred_check_branch
      %34 = sbr.rel (0) target = $region21
    $region20: #{generator_forward.1} parent=1 // pred_region
      _
    $region21: #{generator_forward.1} parent=1 // pred_fallthru
      _
    // Predicated region
    $region22: #{generator_forward.1} parent=1 // pred_check
      _
    $region23: #{generator_forward.1} parent=1 // pred_check_branch
      %36 = sbr.rel (0) target = $region25
    $region24: #{generator_forward.1} parent=1 // pred_region
      %38 = vsyncadd [#allocation5], 0
      %s39 = sshll.u32 %s5, 4
      %s40 = int_to_ptr.hbm [resolvable:$true] %s39
      %s41 = sshll.u32 [#allocation4], 4
      %s42 = int_to_ptr.vmem [resolvable:$true] %s41
      %47 = dma.hbm_to_vmem [thread:$0]  %s40, 2048, %s42, [#allocation5], 128, 128, 8
    $region25: #{generator_forward.1} parent=1 // pred_fallthru
      _
    // Predicated region
    $region26: #{generator_forward.1} parent=1 // pred_check
      _
    $region27: #{generator_forward.1} parent=1 // pred_check_branch
      %49 = sbr.rel (0) target = $region29
    $region28: #{generator_forward.1} parent=1 // pred_region
      _
    $region29: #{generator_forward.1} parent=1 // pred_fallthru
      _
    // Predicated region
    $region30: #{generator_forward.1} parent=1 // pred_check
      _
    $region31: #{generator_forward.1} parent=1 // pred_check_branch
      %51 = sbr.rel (0) target = $region33
    $region32: #{generator_forward.1} parent=1 // pred_region
      %53 = dma.done [#allocation3], 2048
    $region33: #{generator_forward.1} parent=1 // pred_fallthru
      _
    // Predicated region
    $region34: #{generator_forward.1} parent=1 // pred_check
      _
    $region35: #{generator_forward.1} parent=1 // pred_check_branch
      %55 = sbr.rel (0) target = $region37
    $region36: #{generator_forward.1} parent=1 // pred_region
      %57 = dma.done [#allocation5], 2048
    $region37: #{generator_forward.1} parent=1 // pred_fallthru
      _
    %v58 = vld [vmem:[%s0] sm:$0xff]
    %v59 = vld [vmem:[%s1] sm:$0x7]
    %61 = vset.pattern.permute.xlu0 0
    %62 = vperm.xlu0 %61, %v58
    %v63 = vpop.permute.xlu0 %62
    %v65 = vperm.slane %v59, 0
    %v66 = vmul.f32 %v63, %v65
    %67 = vset.pattern.permute.xlu0 1
    %68 = vperm.xlu0 %67, %v58
    %v69 = vpop.permute.xlu0 %68
    %v71 = vperm.slane %v59, 1
    %v72 = vmul.f32 %v69, %v71
    %v73 = vadd.f32 %v66, %v72
    %74 = vset.pattern.permute.xlu0 2
    %75 = vperm.xlu0 %74, %v58
    %v76 = vpop.permute.xlu0 %75
    %v78 = vperm.slane %v59, 2
    %v79 = vmul.f32 %v76, %v78
    %v80 = vadd.f32 %v73, %v79
    %v81 = vld [vmem:[%s2] sm:$0x1]
    %v83 = vperm.slane %v81, 0
    %v85 = vadd.f32 %v80, %v83
    %v86 = vmax.f32 %v85, 0.0
    %v87 = vld [vmem:[#allocation2] sm:$0xff]
    %v88 = vld [vmem:[#allocation2 + $0x8] sm:$0xff]
    %v89 = vld [vmem:[#allocation2 + $0x10] sm:$0xff]
    %v90 = vld [vmem:[#allocation2 + $0x18] sm:$0xff]
    %v91 = vld [vmem:[#allocation2 + $0x20] sm:$0xff]
    %v92 = vld [vmem:[#allocation2 + $0x28] sm:$0xff]
    %v93 = vld [vmem:[#allocation2 + $0x30] sm:$0xff]
    %v94 = vld [vmem:[#allocation2 + $0x38] sm:$0xff]
    %v95 = vld [vmem:[#allocation2 + $0x40] sm:$0xff]
    %v96 = vld [vmem:[#allocation2 + $0x48] sm:$0xff]
    %v97 = vld [vmem:[#allocation2 + $0x50] sm:$0xff]
    %v98 = vld [vmem:[#allocation2 + $0x58] sm:$0xff]
    %v99 = vld [vmem:[#allocation2 + $0x60] sm:$0xff]
    %v100 = vld [vmem:[#allocation2 + $0x68] sm:$0xff]
    %v101 = vld [vmem:[#allocation2 + $0x70] sm:$0xff]
    %v102 = vld [vmem:[#allocation2 + $0x78] sm:$0xff]
    %v103 = vld [vmem:[%s4] sm:$0x1]
    %v105 = vperm.slane %v103, 0
    %107 = vmatpush.msra.mxu0 %v102
    %108 = vmatpush.msra.mxu0 %v101
    %109 = vmatpush.msra.mxu0 %v100
    %110 = vmatpush.msra.mxu0 %v99
    %111 = vmatpush.msra.mxu0 %v98
    %112 = vmatpush.msra.mxu0 %v97
    %113 = vmatpush.msra.mxu0 %v96
    %114 = vmatpush.msra.mxu0 %v95
    %115 = vmatpush.msra.mxu0 %v94
    %116 = vmatpush.msra.mxu0 %v93
    %117 = vmatpush.msra.mxu0 %v92
    %118 = vmatpush.msra.mxu0 %v91
    %119 = vmatpush.msra.mxu0 %v90
    %120 = vmatpush.msra.mxu0 %v89
    %121 = vmatpush.msra.mxu0 %v88
    %122 = vmatpush.msra.mxu0 %v87
    %123 = vmatmul.f32.gmra.mxu0 %v86
    %v124 = vpop.f32.mrf.mxu0
    %v125 = vadd.f32 %v105, %v124
    %126 = vdwg.mxu0
    %v127 = vmax.f32 %v125, 0.0
    %v128 = vld [vmem:[#allocation4] sm:$0xff]
    %v129 = vld [vmem:[#allocation4 + $0x8] sm:$0xff]
    %v130 = vld [vmem:[#allocation4 + $0x10] sm:$0xff]
    %v131 = vld [vmem:[#allocation4 + $0x18] sm:$0xff]
    %v132 = vld [vmem:[#allocation4 + $0x20] sm:$0xff]
    %v133 = vld [vmem:[#allocation4 + $0x28] sm:$0xff]
    %v134 = vld [vmem:[#allocation4 + $0x30] sm:$0xff]
    %v135 = vld [vmem:[#allocation4 + $0x38] sm:$0xff]
    %v136 = vld [vmem:[#allocation4 + $0x40] sm:$0xff]
    %v137 = vld [vmem:[#allocation4 + $0x48] sm:$0xff]
    %v138 = vld [vmem:[#allocation4 + $0x50] sm:$0xff]
    %v139 = vld [vmem:[#allocation4 + $0x58] sm:$0xff]
    %v140 = vld [vmem:[#allocation4 + $0x60] sm:$0xff]
    %v141 = vld [vmem:[#allocation4 + $0x68] sm:$0xff]
    %v142 = vld [vmem:[#allocation4 + $0x70] sm:$0xff]
    %v143 = vld [vmem:[#allocation4 + $0x78] sm:$0xff]
    %v144 = vld [vmem:[%s6] sm:$0x1]
    %v146 = vperm.slane %v144, 0
    %148 = vmatpush.msra.mxu0 %v143
    %149 = vmatpush.msra.mxu0 %v142
    %150 = vmatpush.msra.mxu0 %v141
    %151 = vmatpush.msra.mxu0 %v140
    %152 = vmatpush.msra.mxu0 %v139
    %153 = vmatpush.msra.mxu0 %v138
    %154 = vmatpush.msra.mxu0 %v137
    %155 = vmatpush.msra.mxu0 %v136
    %156 = vmatpush.msra.mxu0 %v135
    %157 = vmatpush.msra.mxu0 %v134
    %158 = vmatpush.msra.mxu0 %v133
    %159 = vmatpush.msra.mxu0 %v132
    %160 = vmatpush.msra.mxu0 %v131
    %161 = vmatpush.msra.mxu0 %v130
    %162 = vmatpush.msra.mxu0 %v129
    %163 = vmatpush.msra.mxu0 %v128
    %164 = vmatmul.f32.gmra.mxu0 %v127
    %v165 = vpop.f32.mrf.mxu0
    %v166 = vadd.f32 %v146, %v165
    %167 = vdwg.mxu0
    %vm168 = vcmask 15360
    %169 = vst.msk [vmem:[%s7] sm:$0xff] %vm168, %v166
    // Predicated region
    $region38: #{generator_forward.1} parent=1 // pred_check
      _
    $region39: #{generator_forward.1} parent=1 // pred_check_branch
      %171 = sbr.rel (0) target = $region41
    $region40: #{generator_forward.1} parent=1 // pred_region
      _
    $region41: #{generator_forward.1} parent=1 // pred_fallthru
      _
    // Predicated region
    $region42: #{generator_forward.1} parent=1 // pred_check
      _
    $region43: #{generator_forward.1} parent=1 // pred_check_branch
      %173 = sbr.rel (0) target = $region45
    $region44: #{generator_forward.1} parent=1 // pred_region
      _
    $region45: #{generator_forward.1} parent=1 // pred_fallthru
      _
    %174 = vsyncpa [#allocation3], 1
    %175 = vsyncpa [#allocation5], 1

</llo_original>
